<compile_context>
chip_gen: v7x
topology: tpu7x:2x2x1
jax: 0.10.0
libtpu: 0.0.40
codegen_flags: <defaults>
</compile_context>

<pallas_src>
import jax
import jax.numpy as jnp
from jax.experimental import pallas as pl
from jax.experimental.pallas import tpu as pltpu


def _copy_kernel(pos_ref, out_ref):
    # Forward semantics: output == position_embeddings (identity copy).
    out_ref[...] = pos_ref[...]


def learned_1d_positional_embedding(x, position_embeddings, *, seq_tile=512):
    """Pallas implementation of Learned1DPositionalEmbedding.forward.

    Args:
      x: (batch, seq_len, hidden) input. Unused by the forward (kept only for
         call-signature parity); it is NOT fed to the pallas_call, so no DMA
         traffic is generated for it.
      position_embeddings: (1, seq_len, hidden) learned parameter.
      seq_tile: seq tile size for large, lane-dense tables.
    Returns:
      (1, seq_len, hidden) array equal to position_embeddings.
    """
    one, seq_len, hidden = position_embeddings.shape
    assert one == 1
    if x is not None:
        assert x.shape[1] == seq_len and x.shape[2] == hidden

    dtype = position_embeddings.dtype

    # TODO(synk): in a full ViT this op should be fused into its consumer
    # (the x + pos_emb add / first block) rather than emitted standalone.

    if hidden % 128 == 0:
        # Lane-dense already (hidden is a multiple of 128): drop the leading
        # singleton and tile along seq so the copy software-pipelines HBM
        # reads against VMEM stores; the "parallel" axis lets v7x's two
        # TensorCores each copy half the table (no-op on v5e/v6e).
        pos2d = position_embeddings.reshape(seq_len, hidden)
        tseq = min(seq_tile, seq_len)
        out2d = pl.pallas_call(
            _copy_kernel,
            out_shape=jax.ShapeDtypeStruct((seq_len, hidden), dtype),
            grid=(pl.cdiv(seq_len, tseq),),
            in_specs=[pl.BlockSpec((tseq, hidden), lambda i: (i, 0))],
            out_specs=pl.BlockSpec((tseq, hidden), lambda i: (i, 0)),
            # Identity on the parameter: alias it to the output so no extra
            # HBM output buffer / write-back is needed inside a larger jit.
            input_output_aliases={0: 0},
            compiler_params=pltpu.CompilerParams(
                dimension_semantics=("parallel",)),
        )(pos2d)
        return out2d.reshape(1, seq_len, hidden)

    # Narrow tables (hidden < 128, e.g. toy configs): flatten to a single
    # lane-dense row so stores use full 128-lane vregs instead of 75%-masked
    # partial stores. Whole table fits trivially in VMEM -> single block.
    flat = position_embeddings.reshape(1, seq_len * hidden)
    out = pl.pallas_call(
        _copy_kernel,
        out_shape=jax.ShapeDtypeStruct((1, seq_len * hidden), dtype),
        grid=(1,),
        in_specs=[pl.BlockSpec((1, seq_len * hidden), lambda i: (0, 0))],
        out_specs=pl.BlockSpec((1, seq_len * hidden), lambda i: (0, 0)),
        input_output_aliases={0: 0},
        compiler_params=pltpu.CompilerParams(
            dimension_semantics=("arbitrary",)),
    )(flat)
    return out.reshape(1, seq_len, hidden)


def init_position_embeddings(key, num_patches, hidden_size,
                             initializer_range=0.02, dtype=jnp.float32):
    """trunc_normal_(mean=0, std=initializer_range, a=-2, b=2) init of the
    (1, num_patches + 1, hidden_size) parameter, matching the PyTorch
    module's initialize_weights()."""
    shape = (1, num_patches + 1, hidden_size)
    # torch trunc_normal_ truncates at absolute [-2, 2]; in units of std that
    # is [-2/std, 2/std].
    lo = -2.0 / initializer_range
    hi = 2.0 / initializer_range
    samples = jax.random.truncated_normal(key, lo, hi, shape, jnp.float32)
    return (samples * initializer_range).astype(dtype)


if __name__ == "__main__":
    key = jax.random.PRNGKey(0)
    k_pos, k_x, k_pos2 = jax.random.split(key, 3)

    # --- Case 1: spec config (hidden=32 < 128 -> flattened lane-dense path).
    # image_size=16, patch_size=4 -> num_patches = 16, seq_len = 17 (CLS).
    config = dict(hidden_size=32, image_size=16, patch_size=4,
                  initializer_range=0.02)
    num_patches = (config["image_size"] // config["patch_size"]) ** 2
    seq_len = num_patches + 1
    hidden = config["hidden_size"]
    batch = 2

    position_embeddings = init_position_embeddings(
        k_pos, num_patches, hidden, config["initializer_range"])
    x = jax.random.normal(k_x, (batch, seq_len, hidden), jnp.float32)

    out = learned_1d_positional_embedding(x, position_embeddings)
    out = jax.block_until_ready(out)
    assert out.shape == (1, seq_len, hidden), out.shape
    assert out.dtype == position_embeddings.dtype
    assert bool(jnp.array_equal(out, position_embeddings))

    # --- Case 2: hidden multiple of 128 -> tiled, parallel (megacore) path,
    # including a partial last seq tile (seq=50, tile=16).
    num_patches2, hidden2 = 49, 256          # e.g. image 112 / patch 16
    seq_len2 = num_patches2 + 1              # 50 (CLS included)
    pos2 = init_position_embeddings(k_pos2, num_patches2, hidden2, 0.02)
    x2 = jnp.zeros((batch, seq_len2, hidden2), jnp.float32)

    out2 = learned_1d_positional_embedding(x2, pos2, seq_tile=16)
    out2 = jax.block_until_ready(out2)
    assert out2.shape == (1, seq_len2, hidden2), out2.shape
    assert bool(jnp.array_equal(out2, pos2))

    print("KERNEL_OK")
</pallas_src>

<mosaic_0001>
module attributes {stable_mosaic.version = 11 : i64} {
  func.func @_copy_kernel(%arg0: i32, %arg1: memref<1x544xf32, #tpu.memory_space<vmem>>, %arg2: memref<1x544xf32, #tpu.memory_space<vmem>>) attributes {dimension_semantics = [#tpu.dimension_semantics<arbitrary>], iteration_bounds = array<i64: 1>, scalar_prefetch = 0 : i64, scratch_operands = 0 : i64, tpu.core_type = #tpu.core_type<tc>, window_params = [{pipeline_mode = #tpu.pipeline_mode<synchronous>, transform_indices = @transform_0, window_bounds = array<i64: 1, 544>}, {pipeline_mode = #tpu.pipeline_mode<synchronous>, transform_indices = @transform_1, window_bounds = array<i64: 1, 544>}]} {
    %c0 = arith.constant 0 : index
    %c0_0 = arith.constant 0 : index
    %0 = vector.load %arg1[%c0, %c0_0] : memref<1x544xf32, #tpu.memory_space<vmem>>, vector<1x544xf32>
    %c0_1 = arith.constant 0 : index
    %c0_2 = arith.constant 0 : index
    %1 = vector.load %arg2[%c0_1, %c0_2] : memref<1x544xf32, #tpu.memory_space<vmem>>, vector<1x544xf32>
    tpu.vector_store %arg2[%c0_1, %c0_2], %0 {strides = array<i32>} : memref<1x544xf32, #tpu.memory_space<vmem>>, vector<1x544xf32>,
    return
  }
  func.func @transform_0(%arg0: i32) -> (i32, i32) {
    %c0_i32 = arith.constant 0 : i32
    %c0_i32_0 = arith.constant 0 : i32
    %c0_i32_1 = arith.constant 0 : i32
    return %c0_i32, %c0_i32_0 : i32, i32
  }
  func.func @transform_1(%arg0: i32) -> (i32, i32) {
    %c0_i32 = arith.constant 0 : i32
    %c0_i32_0 = arith.constant 0 : i32
    %c0_i32_1 = arith.constant 0 : i32
    return %c0_i32, %c0_i32_0 : i32, i32
  }
}

</mosaic_0001>

<llo_original>
// kernel: tpu_custom_call.1
$region0: #{tpu_custom_call.1}
  #allocation0 [shape = 'u32[]', space=smem, size = 0x4, offset = 0x4, fixed_abs, tag = 'smem constant byte address 0x4 - core index']
  #allocation1 [shape = 'u32[144,128]{1,0:T(1,128)}', space=vmem, size = 0x12000, scoped, tag = 'internal scratch']
  %s0 = inlined_call_operand.hbm [shape: f32[1,544], index: 0, kind: input, shape index: {}, may-alias: {0,1}]
  %s1 = inlined_call_operand.hbm [shape: f32[1,544], index: 1, kind: output, shape index: {}, may-alias: {0,1}]
  %s2 = sld [smem:[#allocation0]]
  $region18: #{tpu_custom_call.1} parent=0
    _
  %s4 = ssub.s32 1, %s2
  %s5 = scalar_select 0, %s4, %s2
  $region1: #{tpu_custom_call.1} parent=0
    #allocation2 [shape = 'u8[2560]{0}', space=vmem, size = 0xc00, scoped, tag = 'input window, operand 0, single buffered']
    #allocation3 [shape = 's32[1]{0}', space=sflag, size = 0x4, scoped, tag = 'scoped memory for tpu_custom_call.1']
    #allocation4 [shape = 's32[1]{0}', space=sflag, size = 0x4, scoped, tag = 'scoped memory for tpu_custom_call.1']
    #allocation5 [shape = 'u8[2560]{0}', space=vmem, size = 0xc00, scoped, tag = 'output window, operand 0, single buffered']
    %6 = vsyncpa [#allocation3], 0
    %7 = vsyncpa [#allocation4], 0
    // Predicated region
    $region2: #{tpu_custom_call.1} parent=1 // pred_check
      _
    $region3: #{tpu_custom_call.1} parent=1 // pred_check_branch
      %9 = sbr.rel (0) target = $region5
    $region4: #{tpu_custom_call.1} parent=1 // pred_region
      %s11 = ssub.s32 80, 80
      %12 = vsyncadd [#allocation3], %s11
      %s14 = sshll.u32 [#allocation2], 4
      %s15 = int_to_ptr.vmem [resolvable:$true] %s14
      %17 = dma.hbm_to_vmem [thread:$0]  %s0, 80, %s15, [#allocation3]
    $region5: #{tpu_custom_call.1} parent=1 // pred_fallthru
      _
    // Predicated region
    $region6: #{tpu_custom_call.1} parent=1 // pred_check
      _
    $region7: #{tpu_custom_call.1} parent=1 // pred_check_branch
      %19 = sbr.rel (0) target = $region9
    $region8: #{tpu_custom_call.1} parent=1 // pred_region
      %20 = dma.done [#allocation3], 80
    $region9: #{tpu_custom_call.1} parent=1 // pred_fallthru
      _
    %v21 = vld [vmem:[#allocation2] sm:$0x1f]
    %v22 = vlaneseq
    %vm23 = vcmp.ge.s32.totalorder %v22, 0
    %vm24 = vcmp.lt.s32.totalorder %v22, 544
    %vm25 = vmand %vm23, %vm24
    %26 = vst.msk [vmem:[#allocation5] sm:$0x1f] %vm25, %v21
    // Predicated region
    $region10: #{tpu_custom_call.1} parent=1 // pred_check
      _
    $region11: #{tpu_custom_call.1} parent=1 // pred_check_branch
      %28 = sbr.rel (0) target = $region13
    $region12: #{tpu_custom_call.1} parent=1 // pred_region
      %s30 = ssub.s32 80, 80
      %31 = vsyncadd [#allocation4], %s30
      %s33 = sshll.u32 [#allocation5], 4
      %s34 = int_to_ptr.vmem [resolvable:$true] %s33
      %36 = dma.vmem_to_hbm [thread:$0]  %s34, 80, %s1, [#allocation4]
    $region13: #{tpu_custom_call.1} parent=1 // pred_fallthru
      _
    // Predicated region
    $region14: #{tpu_custom_call.1} parent=1 // pred_check
      _
    $region15: #{tpu_custom_call.1} parent=1 // pred_check_branch
      %38 = sbr.rel (0) target = $region17
    $region16: #{tpu_custom_call.1} parent=1 // pred_region
      %39 = dma.done [#allocation4], 80
    $region17: #{tpu_custom_call.1} parent=1 // pred_fallthru
      _
    %40 = vsyncpa [#allocation3], 1
    %41 = vsyncpa [#allocation4], 1

</llo_original>
